<compile_context>
chip_gen: v7x
topology: tpu7x:2x2x1
jax: 0.10.0
libtpu: 0.0.40
codegen_flags: <defaults>
</compile_context>

<pallas_src>
import functools

import jax
import jax.numpy as jnp
from jax.experimental import pallas as pl
from jax.experimental.pallas import tpu as pltpu

EPS = 1e-15


def _round_up(x, m):
    return ((x + m - 1) // m) * m


def _recon_terms_kernel(zi_ref, zj_ref, out_ref, *, block_e, n_pos_tiles,
                        e_pos, e_pos_pad, e_neg):
    """Per-edge loss terms for one tile of edges.

    Positive tiles:  -log(sigmoid(<zi, zj>) + EPS)
    Negative tiles:  -log(1 - sigmoid(<zi, zj>) + EPS)
    Padded rows are written as 0 so the outside sum is exact.
    """
    i = pl.program_id(0)

    zi = zi_ref[...].astype(jnp.float32)                    # (block_e, D)
    zj = zj_ref[...].astype(jnp.float32)                    # (block_e, D)
    logits = jnp.sum(zi * zj, axis=-1, keepdims=True)       # (block_e, 1)
    p = jax.nn.sigmoid(logits)

    is_pos = i < n_pos_tiles                                 # scalar bool
    # Select between p and (1 - p) BEFORE the single log so the exact EPS
    # semantics of the reference are preserved (no log-sigmoid refactor).
    val = jnp.where(is_pos, p, 1.0 - p)
    term = -jnp.log(val + EPS)

    # Mask padded rows (per-section validity limits are static ints).
    row = jax.lax.broadcasted_iota(jnp.int32, term.shape, 0) + i * block_e
    limit = jnp.where(is_pos, e_pos, e_pos_pad + e_neg)
    term = jnp.where(row < limit, term, 0.0)

    out_ref[...] = term


def _choose_block_e(block_e, max_edges, d, itemsize,
                    vmem_budget_bytes=40 * 1024 * 1024):
    """Clamp the edge-tile size to the problem size and the VMEM budget."""
    block_e = max(8, _round_up(min(block_e, _round_up(max_edges, 8)), 8))

    def vmem_bytes(be):
        # zi + zj double-buffered tiles + lane-padded (be, 1) output buffers.
        return 2 * 2 * be * d * itemsize + 2 * be * 128 * 4

    while block_e > 8 and vmem_bytes(block_e) > vmem_budget_bytes:
        block_e //= 2
    return max(8, _round_up(block_e, 8))


@functools.partial(jax.jit, static_argnames=("block_e",))
def recon_loss(z, pos_edge_index, neg_edge_index, *, block_e=512):
    """Forward pass of ReconLoss.

    z: (N, D) float32 (or bfloat16) node embeddings
    pos_edge_index: (2, E_pos) int32, neg_edge_index: (2, E_neg) int32
    """
    # TODO(synk): negative_sampling (used when neg_edge_index is None in the
    # PyTorch module) is stochastic and has no deterministic Pallas
    # equivalent; negative edges must be supplied explicitly.
    e_pos = int(pos_edge_index.shape[1])
    e_neg = int(neg_edge_index.shape[1])
    # NOTE: e_pos == 0 or e_neg == 0 yields inf/nan, same as the torch module.

    _, d = z.shape
    itemsize = jnp.dtype(z.dtype).itemsize
    block_e = _choose_block_e(block_e, max(e_pos, e_neg), d, itemsize)

    e_pos_pad = _round_up(e_pos, block_e)
    e_neg_pad = _round_up(e_neg, block_e)
    e_total = e_pos_pad + e_neg_pad
    n_tiles = e_total // block_e
    n_pos_tiles = e_pos_pad // block_e

    # Pad only the tiny int32 index arrays (pad with node 0; those rows are
    # masked to zero inside the kernel), then gather once.
    # TODO(synk): fusing the row gather into the kernel (resident-z VMEM +
    # scalar-prefetched indices, or a manual DMA gather) would roughly halve
    # HBM traffic, but needs Mosaic dynamic-gather support; kept in XLA here.
    def pad_idx(idx, target):
        return jnp.pad(idx.astype(jnp.int32), (0, target - idx.shape[0]))

    idx_i = jnp.concatenate([pad_idx(pos_edge_index[0], e_pos_pad),
                             pad_idx(neg_edge_index[0], e_neg_pad)])
    idx_j = jnp.concatenate([pad_idx(pos_edge_index[1], e_pos_pad),
                             pad_idx(neg_edge_index[1], e_neg_pad)])
    zi = jnp.take(z, idx_i, axis=0)                          # (E_total, D)
    zj = jnp.take(z, idx_j, axis=0)                          # (E_total, D)

    kernel = functools.partial(
        _recon_terms_kernel, block_e=block_e, n_pos_tiles=n_pos_tiles,
        e_pos=e_pos, e_pos_pad=e_pos_pad, e_neg=e_neg)

    terms = pl.pallas_call(
        kernel,
        out_shape=jax.ShapeDtypeStruct((e_total, 1), jnp.float32),
        grid=(n_tiles,),
        in_specs=[
            pl.BlockSpec((block_e, d), lambda i: (i, 0)),
            pl.BlockSpec((block_e, d), lambda i: (i, 0)),
        ],
        out_specs=pl.BlockSpec((block_e, 1), lambda i: (i, 0)),
        compiler_params=pltpu.CompilerParams(
            # No cross-step state -> fully parallel grid (megacore-friendly).
            dimension_semantics=("parallel",),
            vmem_limit_bytes=48 * 1024 * 1024,
        ),
    )(zi, zj)

    terms = terms[:, 0]
    pos_loss = jnp.sum(terms[:e_pos_pad]) / e_pos
    neg_loss = jnp.sum(terms[e_pos_pad:]) / e_neg
    return pos_loss + neg_loss


def _recon_loss_ref(z, pos_edge_index, neg_edge_index):
    """Pure-JAX reference for verification (mirrors the PyTorch forward)."""
    def decoder(z, ei):
        val = jnp.sum(z[ei[0]] * z[ei[1]], axis=1)
        return jax.nn.sigmoid(val)

    pos_loss = -jnp.mean(jnp.log(decoder(z, pos_edge_index) + EPS))
    neg_loss = -jnp.mean(jnp.log(1.0 - decoder(z, neg_edge_index) + EPS))
    return pos_loss + neg_loss


if __name__ == "__main__":
    key = jax.random.PRNGKey(0)
    k_z, k_pos, k_neg = jax.random.split(key, 3)

    num_nodes = 16
    hidden = 32
    num_pos_edges = 12
    sampling_times = 2
    num_neg_edges = num_pos_edges * sampling_times

    z = jax.random.normal(k_z, (num_nodes, hidden), dtype=jnp.float32)
    pos_edge_index = jax.random.randint(
        k_pos, (2, num_pos_edges), 0, num_nodes, dtype=jnp.int32)
    neg_edge_index = jax.random.randint(
        k_neg, (2, num_neg_edges), 0, num_nodes, dtype=jnp.int32)

    loss = recon_loss(z, pos_edge_index, neg_edge_index)
    loss = jax.block_until_ready(loss)

    ref = _recon_loss_ref(z, pos_edge_index, neg_edge_index)
    assert jnp.isfinite(loss), loss
    assert jnp.allclose(loss, ref, rtol=1e-4, atol=1e-4), (loss, ref)

    print("KERNEL_OK")
</pallas_src>

<mosaic_0001>
module attributes {stable_mosaic.version = 11 : i64} {
  func.func @_recon_terms_kernel(%arg0: i32, %arg1: memref<24x32xf32, #tpu.memory_space<vmem>>, %arg2: memref<24x32xf32, #tpu.memory_space<vmem>>, %arg3: memref<24x1xf32, #tpu.memory_space<vmem>>) attributes {dimension_semantics = [#tpu.dimension_semantics<parallel>], iteration_bounds = array<i64: 2>, scalar_prefetch = 0 : i64, scratch_operands = 0 : i64, tpu.core_type = #tpu.core_type<tc>, window_params = [{transform_indices = @transform_0, window_bounds = array<i64: 24, 32>}, {transform_indices = @transform_1, window_bounds = array<i64: 24, 32>}, {transform_indices = @transform_2, window_bounds = array<i64: 24, 1>}]} {
    %c0 = arith.constant 0 : index
    %c0_0 = arith.constant 0 : index
    %0 = vector.load %arg1[%c0, %c0_0] : memref<24x32xf32, #tpu.memory_space<vmem>>, vector<24x32xf32>
    %c0_1 = arith.constant 0 : index
    %c0_2 = arith.constant 0 : index
    %1 = vector.load %arg2[%c0_1, %c0_2] : memref<24x32xf32, #tpu.memory_space<vmem>>, vector<24x32xf32>
    %2 = arith.mulf %0, %1 : vector<24x32xf32>
    %cst = arith.constant dense<0.000000e+00> : vector<24xf32>
    %3 = vector.multi_reduction <add>, %2, %cst [1] : vector<24x32xf32> to vector<24xf32>
    %4 = vector.shape_cast %3 : vector<24xf32> to vector<24x1xf32>
    %5 = arith.negf %4 : vector<24x1xf32>
    %6 = math.exp %5 : vector<24x1xf32>
    %cst_3 = arith.constant 1.000000e+00 : f32
    %7 = vector.broadcast %cst_3 : f32 to vector<24x1xf32>
    %8 = arith.addf %7, %6 : vector<24x1xf32>
    %9 = arith.divf %7, %8 : vector<24x1xf32>
    %c1_i32 = arith.constant 1 : i32
    %10 = arith.cmpi slt, %arg0, %c1_i32 : i32
    %cst_4 = arith.constant 1.000000e+00 : f32
    %11 = vector.broadcast %cst_4 : f32 to vector<24x1xf32>
    %12 = arith.subf %11, %9 : vector<24x1xf32>
    %13 = arith.select %10, %9, %12 : vector<24x1xf32>
    %cst_5 = arith.constant 1.000000e-15 : f32
    %14 = vector.broadcast %cst_5 : f32 to vector<24x1xf32>
    %15 = arith.addf %13, %14 : vector<24x1xf32>
    %16 = math.log %15 : vector<24x1xf32>
    %cst_6 = arith.constant 0.000000e+00 : f32
    %17 = vector.broadcast %cst_6 : f32 to vector<24x1xf32>
    %18 = arith.subf %17, %16 : vector<24x1xf32>
    %19 = tpu.iota {dimensions = array<i32: 0>} : vector<24x1xi32>
    %c24_i32 = arith.constant 24 : i32
    %20 = arith.muli %arg0, %c24_i32 : i32
    %21 = vector.broadcast %20 : i32 to vector<24x1xi32>
    %22 = arith.addi %19, %21 : vector<24x1xi32>
    %c12_i32 = arith.constant 12 : i32
    %c48_i32 = arith.constant 48 : i32
    %23 = arith.select %10, %c12_i32, %c48_i32 : i32
    %24 = vector.broadcast %23 : i32 to vector<24x1xi32>
    %25 = arith.cmpi slt, %22, %24 : vector<24x1xi32>
    %cst_7 = arith.constant 0.000000e+00 : f32
    %26 = vector.broadcast %cst_7 : f32 to vector<24x1xf32>
    %27 = arith.select %25, %18, %26 : vector<24x1xi1>, vector<24x1xf32>
    %c0_8 = arith.constant 0 : index
    %c0_9 = arith.constant 0 : index
    %28 = vector.load %arg3[%c0_8, %c0_9] : memref<24x1xf32, #tpu.memory_space<vmem>>, vector<24x1xf32>
    tpu.vector_store %arg3[%c0_8, %c0_9], %27 {strides = array<i32>} : memref<24x1xf32, #tpu.memory_space<vmem>>, vector<24x1xf32>,
    return
  }
  func.func @transform_0(%arg0: i32) -> (i32, i32) {
    %c0_i32 = arith.constant 0 : i32
    %c0_i32_0 = arith.constant 0 : i32
    return %arg0, %c0_i32 : i32, i32
  }
  func.func @transform_1(%arg0: i32) -> (i32, i32) {
    %c0_i32 = arith.constant 0 : i32
    %c0_i32_0 = arith.constant 0 : i32
    return %arg0, %c0_i32 : i32, i32
  }
  func.func @transform_2(%arg0: i32) -> (i32, i32) {
    %c0_i32 = arith.constant 0 : i32
    %c0_i32_0 = arith.constant 0 : i32
    return %arg0, %c0_i32 : i32, i32
  }
}

</mosaic_0001>

<llo_original>
// kernel: recon_loss.1
$region0: #{recon_loss.1}
  #allocation0 [shape = 'u32[]', space=smem, size = 0x4, offset = 0x4, fixed_abs, tag = 'smem constant byte address 0x4 - core index']
  #allocation1 [shape = 'u32[144,128]{1,0:T(1,128)}', space=vmem, size = 0x12000, scoped, tag = 'internal scratch']
  %s0 = inlined_call_operand.vmem [shape: f32[48,32], index: 0, kind: input, shape index: {}]
  %s1 = inlined_call_operand.vmem [shape: f32[48,32], index: 1, kind: input, shape index: {}]
  %s2 = inlined_call_operand.vmem [shape: f32[48,1], index: 2, kind: output, shape index: {}]
  %s3 = sld [smem:[#allocation0]]
  $region41: #{recon_loss.1} parent=0
    _
  %s5 = ssub.s32 1, %s3
  %s6 = scalar_select 0, %s5, %s3
  loop: start=0, step=1, limit=4
  $region2: #{recon_loss.1} parent=0 // loop_pre_header
    _
  $region3: #{recon_loss.1} parent=0 // loop_header
    %s8 = sphi 0, %s12
    %p9 = scmp.ge.s32.totalorder %s8, 4
    %s18 = sphi 0, %s20
    %s21 = sphi 0, %s18
    %s22 = sphi 0, %s21
    %s38 = sphi 0, %s22
    %s44 = sphi 0, %s46
    %s47 = sphi 0, %s44
    %s48 = sphi 0, %s47
    %s64 = sphi 0, %s48
    %s70 = sphi 0, %s72
    %s73 = sphi 0, %s70
    %s74 = sphi 0, %s73
    %s90 = sphi 0, %s74
  $region4: #{recon_loss.1} parent=0 // loop_header_branch
    %11 = sbr.rel (%p9) target = $region8
  $region5: #{recon_loss.1} parent=0 // loop_body
    %s13 = ssub.s32 %s8, 1
    %s14 = ssub.s32 %s8, 2
    %s15 = sadd.s32 %s8, 1
    %s16 = ssub.s32 %s8, %s15
    %p17 = scmp.eq.s32.totalorder %s16, 0
    %s19 = sadd.s32 %s18, 1
    %s20 = scalar_select %p17, %s18, %s19
    %p23 = pneg %p17
    %p24 = scmp.eq.s32.totalorder %s8, 1
    %p25 = por %p23, %p24
    %p26 = scmp.ne.s32.totalorder %s18, %s21
    %p27 = scmp.eq.s32.totalorder %s8, 0
    %p28 = por %p26, %p27
    %p29 = scmp.ne.s32.totalorder %s18, %s21
    %p30 = scmp.eq.s32.totalorder %s13, 1
    %p31 = por %p29, %p30
    %p32 = scmp.ne.s32.totalorder %s21, %s22
    %p33 = scmp.eq.s32.totalorder %s13, 0
    %p34 = por %p32, %p33
    %p35 = scmp.ne.s32.totalorder %s21, %s22
    %p36 = scmp.eq.s32.totalorder %s14, 1
    %p37 = por %p35, %p36
    %p39 = scmp.ne.s32.totalorder %s22, %s38
    %p40 = scmp.eq.s32.totalorder %s14, 0
    %p41 = por %p39, %p40
    %s42 = ssub.s32 %s8, %s15
    %p43 = scmp.eq.s32.totalorder %s42, 0
    %s45 = sadd.s32 %s44, 1
    %s46 = scalar_select %p43, %s44, %s45
    %p49 = pneg %p43
    %p50 = scmp.eq.s32.totalorder %s8, 1
    %p51 = por %p49, %p50
    %p52 = scmp.ne.s32.totalorder %s44, %s47
    %p53 = scmp.eq.s32.totalorder %s8, 0
    %p54 = por %p52, %p53
    %p55 = scmp.ne.s32.totalorder %s44, %s47
    %p56 = scmp.eq.s32.totalorder %s13, 1
    %p57 = por %p55, %p56
    %p58 = scmp.ne.s32.totalorder %s47, %s48
    %p59 = scmp.eq.s32.totalorder %s13, 0
    %p60 = por %p58, %p59
    %p61 = scmp.ne.s32.totalorder %s47, %s48
    %p62 = scmp.eq.s32.totalorder %s14, 1
    %p63 = por %p61, %p62
    %p65 = scmp.ne.s32.totalorder %s48, %s64
    %p66 = scmp.eq.s32.totalorder %s14, 0
    %p67 = por %p65, %p66
    %s68 = ssub.s32 %s8, %s15
    %p69 = scmp.eq.s32.totalorder %s68, 0
    %s71 = sadd.s32 %s70, 1
    %s72 = scalar_select %p69, %s70, %s71
    %p75 = pneg %p69
    %p76 = scmp.eq.s32.totalorder %s8, 1
    %p77 = por %p75, %p76
    %p78 = scmp.ne.s32.totalorder %s70, %s73
    %p79 = scmp.eq.s32.totalorder %s8, 0
    %p80 = por %p78, %p79
    %p81 = scmp.ne.s32.totalorder %s70, %s73
    %p82 = scmp.eq.s32.totalorder %s13, 1
    %p83 = por %p81, %p82
    %p84 = scmp.ne.s32.totalorder %s73, %s74
    %p85 = scmp.eq.s32.totalorder %s13, 0
    %p86 = por %p84, %p85
    %p87 = scmp.ne.s32.totalorder %s73, %s74
    %p88 = scmp.eq.s32.totalorder %s14, 1
    %p89 = por %p87, %p88
    %p91 = scmp.ne.s32.totalorder %s74, %s90
    %p92 = scmp.eq.s32.totalorder %s14, 0
    %p93 = por %p91, %p92
    %p94 = scmp.le.s32.totalorder 1, %s8
    %p95 = scmp.lt.s32.totalorder %s8, 3
    %p96 = pnand %p94, %p95
    %p97 = pneg %p96
    // Predicated region
    $region9: #{recon_loss.1} parent=5 // pred_check
      _
    $region10: #{recon_loss.1} parent=5 // pred_check_branch
      %99 = sbr.rel (%p96) target = $region12
    $region11: #{recon_loss.1} parent=5 // pred_region
      %s100 = ssub.s32 %s8, 1
    $region12: #{recon_loss.1} parent=5 // pred_fallthru
      _
    %p101 = scmp.lt.s32.totalorder %s8, 2
    // Predicated region
    $region13: #{recon_loss.1} parent=5 // pred_check
      %p102 = pneg %p101
    $region14: #{recon_loss.1} parent=5 // pred_check_branch
      %104 = sbr.rel (%p102) target = $region16
    $region15: #{recon_loss.1} parent=5 // pred_region
      // Predicated region
      $region17: #{recon_loss.1} parent=15 // pred_check
        %p105 = pneg %p28
      $region18: #{recon_loss.1} parent=15 // pred_check_branch
        %107 = sbr.rel (%p105) target = $region20
      $region19: #{recon_loss.1} parent=15 // pred_region
        %s108 = smul.u32 3, %s8
        %p109 = scmp.lt.s32.totalorder %s108, 5
        %s110 = scalar_select %p109, %s108, 5
        %s111 = smul.addr %s110, 8
        %s112 = scalar_lea.vmem %s0, %s111
        %s113 = smul.u32 3, %s8
      $region20: #{recon_loss.1} parent=15 // pred_fallthru
        _
      // Predicated region
      $region21: #{recon_loss.1} parent=15 // pred_check
        %p114 = pneg %p54
      $region22: #{recon_loss.1} parent=15 // pred_check_branch
        %116 = sbr.rel (%p114) target = $region24
      $region23: #{recon_loss.1} parent=15 // pred_region
        %s117 = smul.u32 3, %s8
        %p118 = scmp.lt.s32.totalorder %s117, 5
        %s119 = scalar_select %p118, %s117, 5
        %s120 = smul.addr %s119, 8
        %s121 = scalar_lea.vmem %s1, %s120
        %s122 = smul.u32 3, %s8
      $region24: #{recon_loss.1} parent=15 // pred_fallthru
        _
    $region16: #{recon_loss.1} parent=5 // pred_fallthru
      _
    %p123 = scmp.le.s32.totalorder 1, %s8
    %p124 = scmp.lt.s32.totalorder %s8, 3
    %p125 = pnand %p123, %p124
    %p126 = pneg %p125
    // Predicated region
    $region25: #{recon_loss.1} parent=5 // pred_check
      _
    $region26: #{recon_loss.1} parent=5 // pred_check_branch
      %128 = sbr.rel (%p125) target = $region28
    $region27: #{recon_loss.1} parent=5 // pred_region
      %s129 = ssub.s32 %s8, 1
      %s130 = smul.u32 3, %s13
      %p131 = scmp.lt.s32.totalorder %s130, 5
      %s132 = scalar_select %p131, %s130, 5
      %s133 = smul.addr %s132, 8
      %s134 = scalar_lea.vmem %s0, %s133
      %p135 = pneg %p34
      %p136 = pneg %p31
      %s137 = smul.u32 3, %s13
      %p138 = scmp.lt.s32.totalorder %s137, 5
      %s139 = scalar_select %p138, %s137, 5
      %s140 = smul.addr %s139, 8
      %s141 = scalar_lea.vmem %s1, %s140
      %p142 = pneg %p60
      %p143 = pneg %p57
      %p144 = pneg %p86
      %p145 = pneg %p83
      %s146 = smul.u32 3, %s13
      %p147 = scmp.lt.s32.totalorder %s146, 5
      %s148 = scalar_select %p147, %s146, 5
      %s149 = smul.addr %s148, 8
      %s150 = scalar_lea.vmem %s2, %s149
      %s151 = smul.u32 3, %s13
      %p152 = scmp.lt.s32.totalorder %s151, 5
      %s153 = scalar_select %p152, %s151, 5
      %s154 = smul.addr %s153, 8
      %s155 = scalar_lea.vmem %s0, %s154
      %s156 = smul.u32 3, %s13
      %s157 = smul.u32 3, %s13
      %p158 = scmp.lt.s32.totalorder %s157, 5
      %s159 = scalar_select %p158, %s157, 5
      %s160 = smul.addr %s159, 8
      %s161 = scalar_lea.vmem %s1, %s160
      %s162 = smul.u32 3, %s13
      %s163 = smul.u32 3, %s13
      %p164 = scmp.lt.s32.totalorder %s163, 5
      %s165 = scalar_select %p164, %s163, 5
      %s166 = smul.addr %s165, 8
      %s167 = scalar_lea.vmem %s2, %s166
      %s168 = smul.u32 3, %s13
      %v169 = vld [vmem:[%s155] sm:$0xff]
      %v170 = vld [vmem:[%s155 + $0x8] sm:$0xff]
      %v171 = vld [vmem:[%s155 + $0x10] sm:$0xff]
      %v172 = vld [vmem:[%s161] sm:$0xff]
      %v173 = vld [vmem:[%s161 + $0x8] sm:$0xff]
      %v174 = vld [vmem:[%s161 + $0x10] sm:$0xff]
      %v175 = vmul.f32 %v169, %v172
      %v176 = vmul.f32 %v170, %v173
      %v177 = vmul.f32 %v171, %v174
      %vm178 = vcmask 261120
      %v179 = vsel %vm178, %v175, 0.0
      %180 = vadd.xlane.f32.xlu0 %v179
      %v181 = vpop.xlane.xlu0 %180
      %v182 = vsel %vm178, %v176, 0.0
      %183 = vadd.xlane.f32.xlu0 %v182
      %v184 = vpop.xlane.xlu0 %183
      %v185 = vsel %vm178, %v177, 0.0
      %186 = vadd.xlane.f32.xlu0 %v185
      %v187 = vpop.xlane.xlu0 %186
      %v188 = vxor.u32 %v181, 2147483648
      %v189 = vxor.u32 %v184, 2147483648
      %v190 = vxor.u32 %v187, 2147483648
      %v191 = vmul.f32 %v188, 1.442695
      %v192 = vpow.pop %v191
      %v193 = vmul.f32 %v189, 1.442695
      %v194 = vpow.pop %v193
      %v195 = vmul.f32 %v190, 1.442695
      %v196 = vpow.pop %v195
      %v197 = vadd.f32 %v192, 1.0
      %v198 = vadd.f32 %v194, 1.0
      %v199 = vadd.f32 %v196, 1.0
      %v200 = vrcp.pop %v197
      %v201 = vmul.f32 1.0, %v200
      %v202 = vrcp.pop %v198
      %v203 = vmul.f32 1.0, %v202
      %v204 = vrcp.pop %v199
      %v205 = vmul.f32 1.0, %v204
      %p206 = scmp.lt.s32.totalorder %s13, 1
      %v207 = vsub.f32 1.0, %v201
      %v208 = vsub.f32 1.0, %v203
      %v209 = vsub.f32 1.0, %v205
      %s210 = scalar_select %p206, 1, 0
      %v211 = vstv %s210
      %vm212 = vcmp.eq.s32.totalorder %v211, 1
      %v213 = vsel %vm212, %v201, %v207
      %v214 = vsel %vm212, %v203, %v208
      %v215 = vsel %vm212, %v205, %v209
      %v216 = vadd.f32 %v213, 1e-15
      %v217 = vadd.f32 %v214, 1e-15
      %v218 = vadd.f32 %v215, 1e-15
      %v219 = vlog2.pop %v216
      %v220 = vmul.f32 %v219, 0.6931472
      %v221 = vlog2.pop %v217
      %v222 = vmul.f32 %v221, 0.6931472
      %v223 = vlog2.pop %v218
      %v224 = vmul.f32 %v223, 0.6931472
      %v225 = vsub.f32 0.0, %v220
      %v226 = vsub.f32 0.0, %v222
      %v227 = vsub.f32 0.0, %v224
      %v228 = vlaneseq
      %v229 = vshrl.u32 %v228, 7
      %v230 = vadd.s32 %v229, 8
      %v231 = vadd.s32 %v229, 16
      %s232 = smul.u32 %s13, 24
      %v233 = vstv %s232
      %v234 = vadd.s32 %v229, %v233
      %v235 = vadd.s32 %v230, %v233
      %v236 = vadd.s32 %v231, %v233
      %s237 = scalar_select %p206, 12, 48
      %v238 = vstv %s237
      %vm239 = vcmp.lt.s32.totalorder %v234, %v238
      %vm240 = vcmp.lt.s32.totalorder %v235, %v238
      %vm241 = vcmp.lt.s32.totalorder %v236, %v238
      %v242 = vsel %vm239, %v225, 0.0
      %v243 = vsel %vm240, %v226, 0.0
      %v244 = vsel %vm241, %v227, 0.0
      %vm245 = vcmask 7168
      %246 = vst.msk [vmem:[%s167] sm:$0xff] %vm245, %v242
      %247 = vst.msk [vmem:[%s167 + $0x8] sm:$0xff] %vm245, %v243
      %248 = vst.msk [vmem:[%s167 + $0x10] sm:$0xff] %vm245, %v244
      %s249 = smul.u32 3, %s13
      %p250 = scmp.lt.s32.totalorder %s249, 5
      %s251 = scalar_select %p250, %s249, 5
      %s252 = smul.addr %s251, 8
      %s253 = scalar_lea.vmem %s2, %s252
      // Predicated region
      $region29: #{recon_loss.1} parent=27 // pred_check
        %p254 = pneg %p83
      $region30: #{recon_loss.1} parent=27 // pred_check_branch
        %256 = sbr.rel (%p254) target = $region32
      $region31: #{recon_loss.1} parent=27 // pred_region
        %s257 = smul.u32 3, %s13
      $region32: #{recon_loss.1} parent=27 // pred_fallthru
        _
    $region28: #{recon_loss.1} parent=5 // pred_fallthru
      _
    %p258 = scmp.le.s32.totalorder 2, %s8
    // Predicated region
    $region33: #{recon_loss.1} parent=5 // pred_check
      %p259 = pneg %p258
    $region34: #{recon_loss.1} parent=5 // pred_check_branch
      %261 = sbr.rel (%p259) target = $region36
    $region35: #{recon_loss.1} parent=5 // pred_region
      %s262 = ssub.s32 %s8, 2
      // Predicated region
      $region37: #{recon_loss.1} parent=35 // pred_check
        %p263 = pneg %p89
      $region38: #{recon_loss.1} parent=35 // pred_check_branch
        %265 = sbr.rel (%p263) target = $region40
      $region39: #{recon_loss.1} parent=35 // pred_region
        %s266 = smul.u32 3, %s14
        %p267 = scmp.lt.s32.totalorder %s266, 5
        %s268 = scalar_select %p267, %s266, 5
        %s269 = smul.addr %s268, 8
        %s270 = scalar_lea.vmem %s2, %s269
      $region40: #{recon_loss.1} parent=35 // pred_fallthru
        _
    $region36: #{recon_loss.1} parent=5 // pred_fallthru
      _
  $region6: #{recon_loss.1} parent=0 // loop_footer
    %s12 = sadd.s32 1, %s8
  $region7: #{recon_loss.1} parent=0 // loop_footer_branch
    %7 = sbr.rel target = $region3
  $region8: #{recon_loss.1} parent=0 // loop_exit
    _

</llo_original>
